<compile_context>
chip_gen: v7x
topology: tpu7x:2x2x1
jax: 0.10.0
libtpu: 0.0.40
codegen_flags: <defaults>
</compile_context>

<pallas_src>
import jax
import jax.numpy as jnp
from jax.experimental import pallas as pl
from jax.experimental.pallas import tpu as pltpu

MiB = 1024 * 1024


def _cdiv(a, b):
    return -(-a // b)


def _round_up(x, m):
    return _cdiv(x, m) * m


def _sublane(dtype):
    # Minimum second-to-last tile dim: 8 (f32), 16 (bf16), 32 (int8/fp8).
    return max(8, 32 // jnp.dtype(dtype).itemsize)


def _pad2d(a, rows, cols):
    r, c = a.shape
    if r == rows and c == cols:
        return a
    return jnp.pad(a, ((0, rows - r), (0, cols - c)))


def _vmem_capacity_bytes():
    try:
        return int(pltpu.get_tpu_info().vmem_capacity_bytes)
    except Exception:
        return 64 * MiB  # conservative (v7x-sized) if the query is unavailable


# ----------------------------------------------------------------------------
# One-time eager probe: is pipeline_mode=pl.Buffered(1) supported?
# (Must be called OUTSIDE jit; inside jit we just read the cached flag.)
# ----------------------------------------------------------------------------
_SINGLE_BUFFER_OK = None


def _single_buffer_supported():
    global _SINGLE_BUFFER_OK
    if _SINGLE_BUFFER_OK is None:
        try:
            def _probe(x_ref, o_ref):
                o_ref[...] = x_ref[...] + 1.0

            out = pl.pallas_call(
                _probe,
                out_shape=jax.ShapeDtypeStruct((8, 128), jnp.float32),
                grid_spec=pltpu.PrefetchScalarGridSpec(
                    num_scalar_prefetch=0,
                    grid=(1,),
                    in_specs=[pl.BlockSpec((8, 128), lambda i: (0, 0),
                                           pipeline_mode=pl.Buffered(1))],
                    out_specs=pl.BlockSpec((8, 128), lambda i: (0, 0)),
                ),
            )(jnp.zeros((8, 128), jnp.float32))
            jax.block_until_ready(out)
            _SINGLE_BUFFER_OK = True
        except Exception:
            _SINGLE_BUFFER_OK = False
    return _SINGLE_BUFFER_OK


# ----------------------------------------------------------------------------
# Fused whole-MLP kernel: grid tiles only the batch; weights stay VMEM-resident.
# ----------------------------------------------------------------------------
def _mlp_fused_kernel(*refs):
    x_ref = refs[0]
    o_ref = refs[-1]
    wb = refs[1:-1]
    n_layers = len(wb) // 2

    h = x_ref[...]
    for l in range(n_layers):
        w = wb[2 * l][...]
        b = wb[2 * l + 1][...]
        acc = jnp.dot(h.astype(w.dtype), w, preferred_element_type=jnp.float32)
        acc = acc + b.astype(jnp.float32)
        # Chain intermediates in the weight dtype (one cast after the bias
        # add); no-op for f32 configurations.
        h = acc.astype(w.dtype) if l + 1 < n_layers else acc
    o_ref[...] = h.astype(o_ref.dtype)


def _mlp_fused(x_p, padded_params, out_dtype, tm, vmem_limit, single_buffer):
    Bp, C0p = x_p.shape
    Np_last = padded_params[-1][0].shape[1]
    grid_m = Bp // tm

    def _resident(shape):
        # Constant block index -> loaded once, resident across all grid steps.
        if single_buffer:
            return pl.BlockSpec(shape, lambda i: (0, 0),
                                pipeline_mode=pl.Buffered(1))
        return pl.BlockSpec(shape, lambda i: (0, 0))

    in_specs = [pl.BlockSpec((tm, C0p), lambda i: (i, 0))]
    flat = []
    for w_p, b_p in padded_params:
        kp, np_ = w_p.shape
        in_specs.append(_resident((kp, np_)))
        in_specs.append(_resident((1, np_)))
        flat.extend([w_p, b_p])

    return pl.pallas_call(
        _mlp_fused_kernel,
        out_shape=jax.ShapeDtypeStruct((Bp, Np_last), out_dtype),
        grid_spec=pltpu.PrefetchScalarGridSpec(
            num_scalar_prefetch=0,
            grid=(grid_m,),
            in_specs=in_specs,
            out_specs=pl.BlockSpec((tm, Np_last), lambda i: (i, 0)),
        ),
        compiler_params=pltpu.CompilerParams(
            dimension_semantics=("arbitrary",) if grid_m == 1 else ("parallel",),
            vmem_limit_bytes=vmem_limit,
        ),
    )(x_p, *flat)


# ----------------------------------------------------------------------------
# Fallback: per-layer (M, N, K)-tiled matmul with an f32 accumulator.
# ----------------------------------------------------------------------------
def _linear_tiled_kernel(x_ref, w_ref, b_ref, o_ref, acc_ref):
    k = pl.program_id(2)

    @pl.when(k == 0)
    def _():
        acc_ref[...] = jnp.zeros_like(acc_ref)

    acc_ref[...] += jnp.dot(
        x_ref[...], w_ref[...], preferred_element_type=jnp.float32
    )

    @pl.when(k == pl.num_programs(2) - 1)
    def _():
        # Bias added exactly once, in the reduction epilogue.
        o_ref[...] = (acc_ref[...] + b_ref[...].astype(jnp.float32)).astype(
            o_ref.dtype
        )


def _pick_tile(dim, target):
    """Tile size <= target that minimizes padding of `dim` (ties -> larger)."""
    dp = _round_up(dim, 128)
    if dp <= target:
        return dp
    cands = [c for c in (512, 384, 256, 128) if c <= target]
    return min(cands, key=lambda c: (_round_up(dp, c), -c))


def linear_pallas_tiled(x, w, b):
    """y = x @ w + b with x:(B, K), w:(K, N), b:(1, N) or (N,)."""
    B, K = x.shape
    N = w.shape[1]
    out_dtype = x.dtype
    sub = _sublane(out_dtype)

    cap = _vmem_capacity_bytes()
    big_vmem = cap >= 100 * MiB        # v5e / v6e have 128 MiB; v7x has 64 MiB
    tm_target = 512 if big_vmem else 256
    tn_target = 512 if big_vmem else 256
    tk_target = 512

    # tm: minimize batch padding (e.g. B=300 -> tm=152, Bp=304, not 512).
    n_m = max(1, _cdiv(B, tm_target))
    tm = min(_round_up(_cdiv(B, n_m), sub), _round_up(B, sub))
    Bp = _round_up(B, tm)

    tn = _pick_tile(N, tn_target)
    Np = _round_up(N, tn)
    tk = _pick_tile(K, tk_target)      # e.g. K=640 -> tk=128 (Kp=640, not 1024)
    Kp = _round_up(K, tk)

    x_p = _pad2d(x, Bp, Kp)
    w_p = _pad2d(w, Kp, Np)
    b_p = _pad2d(jnp.reshape(b, (1, -1)), 1, Np)

    x_item = jnp.dtype(x.dtype).itemsize
    w_item = jnp.dtype(w.dtype).itemsize
    est = (2 * tm * tk * x_item        # double-buffered x tile
           + 2 * tk * tn * w_item      # double-buffered w tile
           + tm * tn * 4               # f32 accumulator
           + 2 * tm * tn * x_item      # double-buffered output tile
           + 2 * tn * w_item)          # bias tile
    vmem_limit = int(min(cap - 16 * MiB, max(32 * MiB, 2 * est + 8 * MiB)))

    out_p = pl.pallas_call(
        _linear_tiled_kernel,
        out_shape=jax.ShapeDtypeStruct((Bp, Np), out_dtype),
        grid_spec=pltpu.PrefetchScalarGridSpec(
            num_scalar_prefetch=0,
            grid=(Bp // tm, Np // tn, Kp // tk),
            in_specs=[
                pl.BlockSpec((tm, tk), lambda i, j, k: (i, k)),
                pl.BlockSpec((tk, tn), lambda i, j, k: (k, j)),
                pl.BlockSpec((1, tn), lambda i, j, k: (0, j)),
            ],
            out_specs=pl.BlockSpec((tm, tn), lambda i, j, k: (i, j)),
            scratch_shapes=[pltpu.VMEM((tm, tn), jnp.float32)],
        ),
        compiler_params=pltpu.CompilerParams(
            dimension_semantics=("parallel", "parallel", "arbitrary"),
            vmem_limit_bytes=vmem_limit,
        ),
    )(x_p, w_p, b_p)

    if Bp == B and Np == N:
        return out_p
    return out_p[:B, :N]


# ----------------------------------------------------------------------------
# Parameter preparation (pad once) and MLP forward.
# ----------------------------------------------------------------------------
def prepare_mlp_params(params):
    """Pad weights/biases to lane-dense 128-multiples ONCE (not per forward)."""
    dims = [params[0][0].shape[0]] + [w.shape[1] for w, _ in params]
    dims_p = [_round_up(d, 128) for d in dims]
    padded = []
    for i, (w, b) in enumerate(params):
        w_p = _pad2d(jnp.asarray(w), dims_p[i], dims_p[i + 1])
        b_p = _pad2d(jnp.reshape(jnp.asarray(b), (1, -1)), 1, dims_p[i + 1])
        padded.append((w_p, b_p))
    return tuple(padded)


def mlp_forward(x, padded_params, out_features):
    """MLP forward on pre-padded params; out_features is the true final width."""
    orig_shape = x.shape
    if x.ndim != 2:
        x = x.reshape(-1, orig_shape[-1])
    B, _ = x.shape

    dims_p = [padded_params[0][0].shape[0]] + [w.shape[1] for w, _ in padded_params]
    x_item = jnp.dtype(x.dtype).itemsize
    w_item = jnp.dtype(padded_params[0][0].dtype).itemsize

    cap = _vmem_capacity_bytes()
    fused_budget = max(32 * MiB, cap - 24 * MiB)   # ~104 MiB v5e/v6e, ~40 MiB v7x
    single_buffer = bool(_SINGLE_BUFFER_OK)        # probed eagerly in __main__
    wbuf = 1 if single_buffer else 2               # Pallas default double-buffers

    weight_bytes = wbuf * sum(
        (dims_p[i] * dims_p[i + 1] + dims_p[i + 1]) * w_item
        for i in range(len(padded_params))
    )

    sub = _sublane(x.dtype)
    n_m = max(1, _cdiv(B, 256))
    tm = min(_round_up(_cdiv(B, n_m), sub), _round_up(B, sub))
    Bp = _round_up(B, tm)

    act_bytes = (2 * tm * dims_p[0] * x_item       # double-buffered input tile
                 + 2 * tm * dims_p[-1] * x_item    # double-buffered output tile
                 + 2 * tm * max(dims_p) * 4)       # live f32 intermediates

    if weight_bytes + act_bytes <= fused_budget:
        x_p = _pad2d(x, Bp, dims_p[0])
        tot = weight_bytes + act_bytes
        vmem_limit = int(min(cap - 16 * MiB, max(32 * MiB, tot + tot // 2 + 8 * MiB)))
        out_p = _mlp_fused(x_p, padded_params, x.dtype, tm, vmem_limit, single_buffer)
    else:
        # Per-layer tiled matmuls; intermediates stay padded, final crop only.
        # TODO(synk): middle path (activations VMEM-resident, weights streamed
        # in K/N tiles via pltpu.emit_pipeline) for deep MLPs whose weight
        # stack exceeds VMEM, to keep intermediates out of HBM.
        h = _pad2d(x, Bp, dims_p[0])
        for w_p, b_p in padded_params:
            h = linear_pallas_tiled(h, w_p, b_p)
        out_p = h

    if out_p.shape == (B, out_features):
        out = out_p
    else:
        out = out_p[:B, :out_features]

    if len(orig_shape) != 2:
        out = out.reshape(*orig_shape[:-1], out_features)
    return out


mlp_forward_jit = jax.jit(mlp_forward, static_argnames=("out_features",))


# ----------------------------------------------------------------------------
# Params init mirroring nn.Linear default U(-1/sqrt(fan_in), 1/sqrt(fan_in)).
# ----------------------------------------------------------------------------
def init_mlp_params(key, in_features, layer_num, layers, dtype=jnp.float32):
    params = []
    fan_in = in_features
    for i in range(layer_num):
        fan_out = layers[i]
        key, kw, kb = jax.random.split(key, 3)
        bound = 1.0 / jnp.sqrt(fan_in)
        # Stored as (fan_in, fan_out) == W.T relative to PyTorch's (out, in).
        w = jax.random.uniform(kw, (fan_in, fan_out), dtype, -bound, bound)
        b = jax.random.uniform(kb, (1, fan_out), dtype, -bound, bound)
        params.append((w, b))
        fan_in = fan_out
    return params


def mlp_reference(x, params):
    out = x
    for w, b in params:
        out = out @ w + b
    return out


if __name__ == "__main__":
    _single_buffer_supported()  # eager probe for pipeline_mode=pl.Buffered(1)

    key = jax.random.PRNGKey(0)
    key, kx, k2, kx2, k3, kw3, kb3 = jax.random.split(key, 7)

    # --- main demo: MLP(in_features=32, layer_num=3, layers=[64, 32, 16]) ----
    batch, in_features, layer_num, layers = 8, 32, 3, [64, 32, 16]
    x = jax.random.normal(kx, (batch, in_features), dtype=jnp.float32)
    params = init_mlp_params(key, in_features, layer_num, layers)
    padded = prepare_mlp_params(params)

    out = jax.block_until_ready(mlp_forward_jit(x, padded, out_features=layers[-1]))
    ref = mlp_reference(x, params)
    assert out.shape == (batch, layers[-1])
    assert jnp.allclose(out, ref, atol=1e-4, rtol=1e-4), float(
        jnp.max(jnp.abs(out - ref))
    )

    # --- fused path, non-multiple batch (tm right-sized: 300 -> Bp=304) ------
    x2 = jax.random.normal(kx2, (300, 32), dtype=jnp.float32)
    params2 = init_mlp_params(k2, 32, 2, [64, 16])
    padded2 = prepare_mlp_params(params2)
    out2 = jax.block_until_ready(mlp_forward_jit(x2, padded2, out_features=16))
    ref2 = mlp_reference(x2, params2)
    assert out2.shape == (300, 16)
    assert jnp.allclose(out2, ref2, atol=1e-3, rtol=1e-3)

    # --- fallback per-layer tiled matmul (multi-step K reduction, K=640) -----
    x3 = jax.random.normal(k3, (8, 640), dtype=jnp.float32)
    w3 = jax.random.normal(kw3, (640, 256), dtype=jnp.float32) * 0.05
    b3 = jax.random.normal(kb3, (1, 256), dtype=jnp.float32)
    out3 = jax.block_until_ready(linear_pallas_tiled(x3, w3, b3))
    ref3 = x3 @ w3 + b3
    assert out3.shape == (8, 256)
    assert jnp.allclose(out3, ref3, atol=1e-3, rtol=1e-3)

    print("KERNEL_OK")
</pallas_src>

<mosaic_0001>
module attributes {stable_mosaic.version = 11 : i64} {
  func.func @_probe(%arg0: i32, %arg1: memref<8x128xf32, #tpu.memory_space<vmem>>, %arg2: memref<8x128xf32, #tpu.memory_space<vmem>>) attributes {dimension_semantics = [#tpu.dimension_semantics<arbitrary>], iteration_bounds = array<i64: 1>, scalar_prefetch = 0 : i64, scratch_operands = 0 : i64, tpu.core_type = #tpu.core_type<tc>, window_params = [{pipeline_mode = #tpu.pipeline_mode<synchronous>, transform_indices = @transform_0, window_bounds = array<i64: 8, 128>}, {pipeline_mode = #tpu.pipeline_mode<synchronous>, transform_indices = @transform_1, window_bounds = array<i64: 8, 128>}]} {
    %c0 = arith.constant 0 : index
    %c0_0 = arith.constant 0 : index
    %0 = vector.load %arg1[%c0, %c0_0] : memref<8x128xf32, #tpu.memory_space<vmem>>, vector<8x128xf32>
    %cst = arith.constant 1.000000e+00 : f32
    %1 = vector.broadcast %cst : f32 to vector<8x128xf32>
    %2 = arith.addf %0, %1 : vector<8x128xf32>
    %c0_1 = arith.constant 0 : index
    %c0_2 = arith.constant 0 : index
    %3 = vector.load %arg2[%c0_1, %c0_2] : memref<8x128xf32, #tpu.memory_space<vmem>>, vector<8x128xf32>
    tpu.vector_store %arg2[%c0_1, %c0_2], %2 {strides = array<i32>} : memref<8x128xf32, #tpu.memory_space<vmem>>, vector<8x128xf32>,
    return
  }
  func.func @transform_0(%arg0: i32) -> (i32, i32) {
    %c0_i32 = arith.constant 0 : i32
    %c0_i32_0 = arith.constant 0 : i32
    %c0_i32_1 = arith.constant 0 : i32
    return %c0_i32, %c0_i32_0 : i32, i32
  }
  func.func @transform_1(%arg0: i32) -> (i32, i32) {
    %c0_i32 = arith.constant 0 : i32
    %c0_i32_0 = arith.constant 0 : i32
    %c0_i32_1 = arith.constant 0 : i32
    return %c0_i32, %c0_i32_0 : i32, i32
  }
}

module attributes {stable_mosaic.version = 11 : i64} {
  func.func @_mlp_fused_kernel(%arg0: i32, %arg1: memref<8x128xf32, #tpu.memory_space<vmem>>, %arg2: memref<128x128xf32, #tpu.memory_space<vmem>>, %arg3: memref<1x128xf32, #tpu.memory_space<vmem>>, %arg4: memref<128x128xf32, #tpu.memory_space<vmem>>, %arg5: memref<1x128xf32, #tpu.memory_space<vmem>>, %arg6: memref<128x128xf32, #tpu.memory_space<vmem>>, %arg7: memref<1x128xf32, #tpu.memory_space<vmem>>, %arg8: memref<8x128xf32, #tpu.memory_space<vmem>>) attributes {dimension_semantics = [#tpu.dimension_semantics<arbitrary>], iteration_bounds = array<i64: 1>, scalar_prefetch = 0 : i64, scratch_operands = 0 : i64, tpu.core_type = #tpu.core_type<tc>, window_params = [{transform_indices = @transform_0, window_bounds = array<i64: 8, 128>}, {pipeline_mode = #tpu.pipeline_mode<synchronous>, transform_indices = @transform_1, window_bounds = array<i64: 128, 128>}, {pipeline_mode = #tpu.pipeline_mode<synchronous>, transform_indices = @transform_2, window_bounds = array<i64: 1, 128>}, {pipeline_mode = #tpu.pipeline_mode<synchronous>, transform_indices = @transform_3, window_bounds = array<i64: 128, 128>}, {pipeline_mode = #tpu.pipeline_mode<synchronous>, transform_indices = @transform_4, window_bounds = array<i64: 1, 128>}, {pipeline_mode = #tpu.pipeline_mode<synchronous>, transform_indices = @transform_5, window_bounds = array<i64: 128, 128>}, {pipeline_mode = #tpu.pipeline_mode<synchronous>, transform_indices = @transform_6, window_bounds = array<i64: 1, 128>}, {transform_indices = @transform_7, window_bounds = array<i64: 8, 128>}]} {
    %c0 = arith.constant 0 : index
    %c0_0 = arith.constant 0 : index
    %0 = vector.load %arg1[%c0, %c0_0] : memref<8x128xf32, #tpu.memory_space<vmem>>, vector<8x128xf32>
    %c0_1 = arith.constant 0 : index
    %c0_2 = arith.constant 0 : index
    %1 = vector.load %arg2[%c0_1, %c0_2] : memref<128x128xf32, #tpu.memory_space<vmem>>, vector<128x128xf32>
    %c0_3 = arith.constant 0 : index
    %c0_4 = arith.constant 0 : index
    %2 = vector.load %arg3[%c0_3, %c0_4] : memref<1x128xf32, #tpu.memory_space<vmem>>, vector<1x128xf32>
    %cst = arith.constant dense<0.000000e+00> : vector<8x128xf32>
    %3 = tpu.matmul %0, %1, %cst {dimension_numbers = #tpu.dot_dimension_numbers<[1], [0], [0], [1], [0, 0, 1, 1], [], []>} : vector<8x128xf32>, vector<128x128xf32>, vector<8x128xf32> -> vector<8x128xf32>
    %4 = vector.broadcast %2 : vector<1x128xf32> to vector<8x128xf32>
    %5 = arith.addf %3, %4 : vector<8x128xf32>
    %c0_5 = arith.constant 0 : index
    %c0_6 = arith.constant 0 : index
    %6 = vector.load %arg4[%c0_5, %c0_6] : memref<128x128xf32, #tpu.memory_space<vmem>>, vector<128x128xf32>
    %c0_7 = arith.constant 0 : index
    %c0_8 = arith.constant 0 : index
    %7 = vector.load %arg5[%c0_7, %c0_8] : memref<1x128xf32, #tpu.memory_space<vmem>>, vector<1x128xf32>
    %cst_9 = arith.constant dense<0.000000e+00> : vector<8x128xf32>
    %8 = tpu.matmul %5, %6, %cst_9 {dimension_numbers = #tpu.dot_dimension_numbers<[1], [0], [0], [1], [0, 0, 1, 1], [], []>} : vector<8x128xf32>, vector<128x128xf32>, vector<8x128xf32> -> vector<8x128xf32>
    %9 = vector.broadcast %7 : vector<1x128xf32> to vector<8x128xf32>
    %10 = arith.addf %8, %9 : vector<8x128xf32>
    %c0_10 = arith.constant 0 : index
    %c0_11 = arith.constant 0 : index
    %11 = vector.load %arg6[%c0_10, %c0_11] : memref<128x128xf32, #tpu.memory_space<vmem>>, vector<128x128xf32>
    %c0_12 = arith.constant 0 : index
    %c0_13 = arith.constant 0 : index
    %12 = vector.load %arg7[%c0_12, %c0_13] : memref<1x128xf32, #tpu.memory_space<vmem>>, vector<1x128xf32>
    %cst_14 = arith.constant dense<0.000000e+00> : vector<8x128xf32>
    %13 = tpu.matmul %10, %11, %cst_14 {dimension_numbers = #tpu.dot_dimension_numbers<[1], [0], [0], [1], [0, 0, 1, 1], [], []>} : vector<8x128xf32>, vector<128x128xf32>, vector<8x128xf32> -> vector<8x128xf32>
    %14 = vector.broadcast %12 : vector<1x128xf32> to vector<8x128xf32>
    %15 = arith.addf %13, %14 : vector<8x128xf32>
    %c0_15 = arith.constant 0 : index
    %c0_16 = arith.constant 0 : index
    %16 = vector.load %arg8[%c0_15, %c0_16] : memref<8x128xf32, #tpu.memory_space<vmem>>, vector<8x128xf32>
    tpu.vector_store %arg8[%c0_15, %c0_16], %15 {strides = array<i32>} : memref<8x128xf32, #tpu.memory_space<vmem>>, vector<8x128xf32>,
    return
  }
  func.func @transform_0(%arg0: i32) -> (i32, i32) {
    %c0_i32 = arith.constant 0 : i32
    %c0_i32_0 = arith.constant 0 : i32
    return %arg0, %c0_i32 : i32, i32
  }
  func.func @transform_1(%arg0: i32) -> (i32, i32) {
    %c0_i32 = arith.constant 0 : i32
    %c0_i32_0 = arith.constant 0 : i32
    %c0_i32_1 = arith.constant 0 : i32
    return %c0_i32, %c0_i32_0 : i32, i32
  }
  func.func @transform_2(%arg0: i32) -> (i32, i32) {
    %c0_i32 = arith.constant 0 : i32
    %c0_i32_0 = arith.constant 0 : i32
    %c0_i32_1 = arith.constant 0 : i32
    return %c0_i32, %c0_i32_0 : i32, i32
  }
  func.func @transform_3(%arg0: i32) -> (i32, i32) {
    %c0_i32 = arith.constant 0 : i32
    %c0_i32_0 = arith.constant 0 : i32
    %c0_i32_1 = arith.constant 0 : i32
    return %c0_i32, %c0_i32_0 : i32, i32
  }
  func.func @transform_4(%arg0: i32) -> (i32, i32) {
    %c0_i32 = arith.constant 0 : i32
    %c0_i32_0 = arith.constant 0 : i32
    %c0_i32_1 = arith.constant 0 : i32
    return %c0_i32, %c0_i32_0 : i32, i32
  }
  func.func @transform_5(%arg0: i32) -> (i32, i32) {
    %c0_i32 = arith.constant 0 : i32
    %c0_i32_0 = arith.constant 0 : i32
    %c0_i32_1 = arith.constant 0 : i32
    return %c0_i32, %c0_i32_0 : i32, i32
  }
  func.func @transform_6(%arg0: i32) -> (i32, i32) {
    %c0_i32 = arith.constant 0 : i32
    %c0_i32_0 = arith.constant 0 : i32
    %c0_i32_1 = arith.constant 0 : i32
    return %c0_i32, %c0_i32_0 : i32, i32
  }
  func.func @transform_7(%arg0: i32) -> (i32, i32) {
    %c0_i32 = arith.constant 0 : i32
    %c0_i32_0 = arith.constant 0 : i32
    return %arg0, %c0_i32 : i32, i32
  }
}

</mosaic_0001>

<llo_original>
// kernel: tpu_custom_call.1
$region0: #{tpu_custom_call.1}
  #allocation0 [shape = 'u32[]', space=smem, size = 0x4, offset = 0x4, fixed_abs, tag = 'smem constant byte address 0x4 - core index']
  #allocation1 [shape = 'u32[144,128]{1,0:T(1,128)}', space=vmem, size = 0x12000, scoped, tag = 'internal scratch']
  %s0 = inlined_call_operand.hbm [shape: f32[8,128], index: 0, kind: input, shape index: {}]
  %s1 = inlined_call_operand.hbm [shape: f32[8,128], index: 1, kind: output, shape index: {}]
  %s2 = sld [smem:[#allocation0]]
  $region18: #{tpu_custom_call.1} parent=0
    _
  %s4 = ssub.s32 1, %s2
  %s5 = scalar_select 0, %s4, %s2
  $region1: #{tpu_custom_call.1} parent=0
    #allocation2 [shape = 'u8[4096]{0}', space=vmem, size = 0x1000, scoped, tag = 'input window, operand 0, single buffered']
    #allocation3 [shape = 's32[1]{0}', space=sflag, size = 0x4, scoped, tag = 'scoped memory for tpu_custom_call.1']
    #allocation4 [shape = 's32[1]{0}', space=sflag, size = 0x4, scoped, tag = 'scoped memory for tpu_custom_call.1']
    #allocation5 [shape = 'u8[4096]{0}', space=vmem, size = 0x1000, scoped, tag = 'output window, operand 0, single buffered']
    %6 = vsyncpa [#allocation3], 0
    %7 = vsyncpa [#allocation4], 0
    // Predicated region
    $region2: #{tpu_custom_call.1} parent=1 // pred_check
      _
    $region3: #{tpu_custom_call.1} parent=1 // pred_check_branch
      %9 = sbr.rel (0) target = $region5
    $region4: #{tpu_custom_call.1} parent=1 // pred_region
      %s11 = ssub.s32 128, 128
      %12 = vsyncadd [#allocation3], %s11
      %s14 = sshll.u32 [#allocation2], 4
      %s15 = int_to_ptr.vmem [resolvable:$true] %s14
      %17 = dma.hbm_to_vmem [thread:$0]  %s0, 128, %s15, [#allocation3]
    $region5: #{tpu_custom_call.1} parent=1 // pred_fallthru
      _
    // Predicated region
    $region6: #{tpu_custom_call.1} parent=1 // pred_check
      _
    $region7: #{tpu_custom_call.1} parent=1 // pred_check_branch
      %19 = sbr.rel (0) target = $region9
    $region8: #{tpu_custom_call.1} parent=1 // pred_region
      %20 = dma.done [#allocation3], 128
    $region9: #{tpu_custom_call.1} parent=1 // pred_fallthru
      _
    %v21 = vld [vmem:[#allocation2] sm:$0xff]
    %v22 = vadd.f32 %v21, 1.0
    %23 = vst [vmem:[#allocation5] sm:$0xff] %v22
    // Predicated region
    $region10: #{tpu_custom_call.1} parent=1 // pred_check
      _
    $region11: #{tpu_custom_call.1} parent=1 // pred_check_branch
      %25 = sbr.rel (0) target = $region13
    $region12: #{tpu_custom_call.1} parent=1 // pred_region
      %s27 = ssub.s32 128, 128
      %28 = vsyncadd [#allocation4], %s27
      %s30 = sshll.u32 [#allocation5], 4
      %s31 = int_to_ptr.vmem [resolvable:$true] %s30
      %33 = dma.vmem_to_hbm [thread:$0]  %s31, 128, %s1, [#allocation4]
    $region13: #{tpu_custom_call.1} parent=1 // pred_fallthru
      _
    // Predicated region
    $region14: #{tpu_custom_call.1} parent=1 // pred_check
      _
    $region15: #{tpu_custom_call.1} parent=1 // pred_check_branch
      %35 = sbr.rel (0) target = $region17
    $region16: #{tpu_custom_call.1} parent=1 // pred_region
      %36 = dma.done [#allocation4], 128
    $region17: #{tpu_custom_call.1} parent=1 // pred_fallthru
      _
    %37 = vsyncpa [#allocation3], 1
    %38 = vsyncpa [#allocation4], 1

// kernel: mlp_forward.1
$region0: #{mlp_forward.1}
  #allocation0 [shape = 'u32[]', space=smem, size = 0x4, offset = 0x4, fixed_abs, tag = 'smem constant byte address 0x4 - core index']
  #allocation1 [shape = 'u32[144,128]{1,0:T(1,128)}', space=vmem, size = 0x12000, scoped, tag = 'internal scratch']
  %s0 = inlined_call_operand.vmem [shape: f32[8,128], index: 0, kind: input, shape index: {}]
  %s1 = inlined_call_operand.hbm [shape: f32[128,128], index: 1, kind: input, shape index: {}]
  %s2 = inlined_call_operand.vmem [shape: f32[1,128], index: 2, kind: input, shape index: {}]
  %s3 = inlined_call_operand.hbm [shape: f32[128,128], index: 3, kind: input, shape index: {}]
  %s4 = inlined_call_operand.vmem [shape: f32[1,128], index: 4, kind: input, shape index: {}]
  %s5 = inlined_call_operand.hbm [shape: f32[128,128], index: 5, kind: input, shape index: {}]
  %s6 = inlined_call_operand.vmem [shape: f32[1,128], index: 6, kind: input, shape index: {}]
  %s7 = inlined_call_operand.hbm [shape: f32[8,128], index: 7, kind: output, shape index: {}]
  %s8 = sld [smem:[#allocation0]]
  $region50: #{mlp_forward.1} parent=0
    _
  %s10 = ssub.s32 1, %s8
  %s11 = scalar_select 0, %s10, %s8
  $region1: #{mlp_forward.1} parent=0
    #allocation2 [shape = 'u8[65536]{0}', space=vmem, size = 0x10000, scoped, tag = 'input window, operand 1, single buffered']
    #allocation3 [shape = 's32[1]{0}', space=sflag, size = 0x4, scoped, tag = 'scoped memory for mlp_forward.1']
    #allocation4 [shape = 's32[1]{0}', space=sflag, size = 0x4, scoped, tag = 'scoped memory for mlp_forward.1']
    #allocation5 [shape = 'u8[65536]{0}', space=vmem, size = 0x10000, scoped, tag = 'input window, operand 3, single buffered']
    #allocation6 [shape = 's32[1]{0}', space=sflag, size = 0x4, scoped, tag = 'scoped memory for mlp_forward.1']
    #allocation7 [shape = 'u8[65536]{0}', space=vmem, size = 0x10000, scoped, tag = 'input window, operand 5, single buffered']
    #allocation8 [shape = 'u8[4096]{0}', space=vmem, size = 0x1000, scoped, tag = 'output window, operand 0, single buffered']
    %12 = vsyncpa [#allocation3], 0
    %13 = vsyncpa [#allocation6], 0
    %14 = vsyncpa [#allocation4], 0
    // Predicated region
    $region2: #{mlp_forward.1} parent=1 // pred_check
      _
    $region3: #{mlp_forward.1} parent=1 // pred_check_branch
      %16 = sbr.rel (0) target = $region5
    $region4: #{mlp_forward.1} parent=1 // pred_region
      _
    $region5: #{mlp_forward.1} parent=1 // pred_fallthru
      _
    // Predicated region
    $region6: #{mlp_forward.1} parent=1 // pred_check
      _
    $region7: #{mlp_forward.1} parent=1 // pred_check_branch
      %18 = sbr.rel (0) target = $region9
    $region8: #{mlp_forward.1} parent=1 // pred_region
      %s20 = ssub.s32 2048, 2048
      %21 = vsyncadd [#allocation3], %s20
      %s22 = sshll.u32 [#allocation2], 4
      %s23 = int_to_ptr.vmem [resolvable:$true] %s22
      %28 = dma.hbm_to_vmem [thread:$0]  %s1, 2048, %s23, [#allocation3], 128, 128, 8
    $region9: #{mlp_forward.1} parent=1 // pred_fallthru
      _
    // Predicated region
    $region10: #{mlp_forward.1} parent=1 // pred_check
      _
    $region11: #{mlp_forward.1} parent=1 // pred_check_branch
      %30 = sbr.rel (0) target = $region13
    $region12: #{mlp_forward.1} parent=1 // pred_region
      _
    $region13: #{mlp_forward.1} parent=1 // pred_fallthru
      _
    // Predicated region
    $region14: #{mlp_forward.1} parent=1 // pred_check
      _
    $region15: #{mlp_forward.1} parent=1 // pred_check_branch
      %32 = sbr.rel (0) target = $region17
    $region16: #{mlp_forward.1} parent=1 // pred_region
      %s34 = ssub.s32 2048, 2048
      %35 = vsyncadd [#allocation6], %s34
      %s36 = sshll.u32 [#allocation5], 4
      %s37 = int_to_ptr.vmem [resolvable:$true] %s36
      %42 = dma.hbm_to_vmem [thread:$0]  %s3, 2048, %s37, [#allocation6], 128, 128, 8
    $region17: #{mlp_forward.1} parent=1 // pred_fallthru
      _
    // Predicated region
    $region18: #{mlp_forward.1} parent=1 // pred_check
      _
    $region19: #{mlp_forward.1} parent=1 // pred_check_branch
      %44 = sbr.rel (0) target = $region21
    $region20: #{mlp_forward.1} parent=1 // pred_region
      _
    $region21: #{mlp_forward.1} parent=1 // pred_fallthru
      _
    // Predicated region
    $region22: #{mlp_forward.1} parent=1 // pred_check
      _
    $region23: #{mlp_forward.1} parent=1 // pred_check_branch
      %46 = sbr.rel (0) target = $region25
    $region24: #{mlp_forward.1} parent=1 // pred_region
      %s48 = ssub.s32 2048, 2048
      %49 = vsyncadd [#allocation6], %s48
      %s50 = sshll.u32 [#allocation7], 4
      %s51 = int_to_ptr.vmem [resolvable:$true] %s50
      %56 = dma.hbm_to_vmem [thread:$0]  %s5, 2048, %s51, [#allocation6], 128, 128, 8
    $region25: #{mlp_forward.1} parent=1 // pred_fallthru
      _
    // Predicated region
    $region26: #{mlp_forward.1} parent=1 // pred_check
      _
    $region27: #{mlp_forward.1} parent=1 // pred_check_branch
      %58 = sbr.rel (0) target = $region29
    $region28: #{mlp_forward.1} parent=1 // pred_region
      _
    $region29: #{mlp_forward.1} parent=1 // pred_fallthru
      _
    // Predicated region
    $region30: #{mlp_forward.1} parent=1 // pred_check
      _
    $region31: #{mlp_forward.1} parent=1 // pred_check_branch
      %60 = sbr.rel (0) target = $region33
    $region32: #{mlp_forward.1} parent=1 // pred_region
      %61 = dma.done [#allocation3], 2048
    $region33: #{mlp_forward.1} parent=1 // pred_fallthru
      _
    // Predicated region
    $region34: #{mlp_forward.1} parent=1 // pred_check
      _
    $region35: #{mlp_forward.1} parent=1 // pred_check_branch
      %63 = sbr.rel (0) target = $region37
    $region36: #{mlp_forward.1} parent=1 // pred_region
      %64 = dma.done [#allocation6], 2048
    $region37: #{mlp_forward.1} parent=1 // pred_fallthru
      _
    // Predicated region
    $region38: #{mlp_forward.1} parent=1 // pred_check
      _
    $region39: #{mlp_forward.1} parent=1 // pred_check_branch
      %66 = sbr.rel (0) target = $region41
    $region40: #{mlp_forward.1} parent=1 // pred_region
      %67 = dma.done [#allocation6], 2048
    $region41: #{mlp_forward.1} parent=1 // pred_fallthru
      _
    %v68 = vld [vmem:[%s0] sm:$0xff]
    %v69 = vld [vmem:[#allocation2] sm:$0xff]
    %v70 = vld [vmem:[#allocation2 + $0x8] sm:$0xff]
    %v71 = vld [vmem:[#allocation2 + $0x10] sm:$0xff]
    %v72 = vld [vmem:[#allocation2 + $0x18] sm:$0xff]
    %v73 = vld [vmem:[#allocation2 + $0x20] sm:$0xff]
    %v74 = vld [vmem:[#allocation2 + $0x28] sm:$0xff]
    %v75 = vld [vmem:[#allocation2 + $0x30] sm:$0xff]
    %v76 = vld [vmem:[#allocation2 + $0x38] sm:$0xff]
    %v77 = vld [vmem:[#allocation2 + $0x40] sm:$0xff]
    %v78 = vld [vmem:[#allocation2 + $0x48] sm:$0xff]
    %v79 = vld [vmem:[#allocation2 + $0x50] sm:$0xff]
    %v80 = vld [vmem:[#allocation2 + $0x58] sm:$0xff]
    %v81 = vld [vmem:[#allocation2 + $0x60] sm:$0xff]
    %v82 = vld [vmem:[#allocation2 + $0x68] sm:$0xff]
    %v83 = vld [vmem:[#allocation2 + $0x70] sm:$0xff]
    %v84 = vld [vmem:[#allocation2 + $0x78] sm:$0xff]
    %v85 = vld [vmem:[%s2] sm:$0x1]
    %v87 = vlaneseq
    %v88 = vshrl.u32 %v87, 7
    %v89 = vsub.s32 0, %v88
    %v90 = vrot.slane %v85, %v89
    %92 = vmatprep.subr.mxu0 0.0
    %93 = vmatpush1.msra.mxu0 %v69
    %94 = vmatprep.subr.mxu0 0.0
    %95 = vmatpush1.msra.mxu0 %v70
    %96 = vmatprep.subr.mxu0 0.0
    %97 = vmatpush1.msra.mxu0 %v71
    %98 = vmatprep.subr.mxu0 0.0
    %99 = vmatpush1.msra.mxu0 %v72
    %100 = vmatprep.subr.mxu0 0.0
    %101 = vmatpush1.msra.mxu0 %v73
    %102 = vmatprep.subr.mxu0 0.0
    %103 = vmatpush1.msra.mxu0 %v74
    %104 = vmatprep.subr.mxu0 0.0
    %105 = vmatpush1.msra.mxu0 %v75
    %106 = vmatprep.subr.mxu0 0.0
    %107 = vmatpush1.msra.mxu0 %v76
    %108 = vmatprep.subr.mxu0 0.0
    %109 = vmatpush1.msra.mxu0 %v77
    %110 = vmatprep.subr.mxu0 0.0
    %111 = vmatpush1.msra.mxu0 %v78
    %112 = vmatprep.subr.mxu0 0.0
    %113 = vmatpush1.msra.mxu0 %v79
    %114 = vmatprep.subr.mxu0 0.0
    %115 = vmatpush1.msra.mxu0 %v80
    %116 = vmatprep.subr.mxu0 0.0
    %117 = vmatpush1.msra.mxu0 %v81
    %118 = vmatprep.subr.mxu0 0.0
    %119 = vmatpush1.msra.mxu0 %v82
    %120 = vmatprep.subr.mxu0 0.0
    %121 = vmatpush1.msra.mxu0 %v83
    %122 = vmatprep.subr.mxu0 0.0
    %123 = vmatpush1.msra.mxu0 %v84
    %124 = vmatprep.subr.mxu0 0.0
    %125 = vmatpush1.msra.mxu0 0.0
    %126 = vmatprep.subr.mxu0 0.0
    %127 = vmatpush1.msra.mxu0 0.0
    %128 = vmatprep.subr.mxu0 0.0
    %129 = vmatpush1.msra.mxu0 0.0
    %130 = vmatprep.subr.mxu0 0.0
    %131 = vmatpush1.msra.mxu0 0.0
    %132 = vmatprep.subr.mxu0 0.0
    %133 = vmatpush1.msra.mxu0 0.0
    %134 = vmatprep.subr.mxu0 0.0
    %135 = vmatpush1.msra.mxu0 0.0
    %136 = vmatprep.subr.mxu0 0.0
    %137 = vmatpush1.msra.mxu0 0.0
    %138 = vmatprep.subr.mxu0 0.0
    %139 = vmatpush1.msra.mxu0 0.0
    %140 = vmatprep.subr.mxu0 0.0
    %141 = vmatpush1.msra.mxu0 0.0
    %142 = vmatprep.subr.mxu0 0.0
    %143 = vmatpush1.msra.mxu0 0.0
    %144 = vmatprep.subr.mxu0 0.0
    %145 = vmatpush1.msra.mxu0 0.0
    %146 = vmatprep.subr.mxu0 0.0
    %147 = vmatpush1.msra.mxu0 0.0
    %148 = vmatprep.subr.mxu0 0.0
    %149 = vmatpush1.msra.mxu0 0.0
    %150 = vmatprep.subr.mxu0 0.0
    %151 = vmatpush1.msra.mxu0 0.0
    %152 = vmatprep.subr.mxu0 0.0
    %153 = vmatpush1.msra.mxu0 0.0
    %154 = vmatprep.subr.mxu0 0.0
    %155 = vmatpush1.msra.mxu0 0.0
    %156 = vmatprep.mubr.f32.mxu0 0.0
    %157 = vmatmul.mubr.f32.gmra.mrb[0].mxu0 %v68
    %v158 = vpop.f32.mrb[0].mxu0
    %v159 = vadd.f32 %v90, %v158
    %v160 = vpop.f32.mrb[0].mxu0
    %161 = vdwg.mxu0
    %v162 = vld [vmem:[#allocation5] sm:$0xff]
    %v163 = vld [vmem:[#allocation5 + $0x8] sm:$0xff]
    %v164 = vld [vmem:[#allocation5 + $0x10] sm:$0xff]
    %v165 = vld [vmem:[#allocation5 + $0x18] sm:$0xff]
    %v166 = vld [vmem:[#allocation5 + $0x20] sm:$0xff]
    %v167 = vld [vmem:[#allocation5 + $0x28] sm:$0xff]
    %v168 = vld [vmem:[#allocation5 + $0x30] sm:$0xff]
    %v169 = vld [vmem:[#allocation5 + $0x38] sm:$0xff]
    %v170 = vld [vmem:[#allocation5 + $0x40] sm:$0xff]
    %v171 = vld [vmem:[#allocation5 + $0x48] sm:$0xff]
    %v172 = vld [vmem:[#allocation5 + $0x50] sm:$0xff]
    %v173 = vld [vmem:[#allocation5 + $0x58] sm:$0xff]
    %v174 = vld [vmem:[#allocation5 + $0x60] sm:$0xff]
    %v175 = vld [vmem:[#allocation5 + $0x68] sm:$0xff]
    %v176 = vld [vmem:[#allocation5 + $0x70] sm:$0xff]
    %v177 = vld [vmem:[#allocation5 + $0x78] sm:$0xff]
    %v178 = vld [vmem:[%s4] sm:$0x1]
    %v180 = vlaneseq
    %v181 = vshrl.u32 %v180, 7
    %v182 = vsub.s32 0, %v181
    %v183 = vrot.slane %v178, %v182
    %185 = vmatprep.subr.mxu0 0.0
    %186 = vmatpush1.msra.mxu0 %v162
    %187 = vmatprep.subr.mxu0 0.0
    %188 = vmatpush1.msra.mxu0 %v163
    %189 = vmatprep.subr.mxu0 0.0
    %190 = vmatpush1.msra.mxu0 %v164
    %191 = vmatprep.subr.mxu0 0.0
    %192 = vmatpush1.msra.mxu0 %v165
    %193 = vmatprep.subr.mxu0 0.0
    %194 = vmatpush1.msra.mxu0 %v166
    %195 = vmatprep.subr.mxu0 0.0
    %196 = vmatpush1.msra.mxu0 %v167
    %197 = vmatprep.subr.mxu0 0.0
    %198 = vmatpush1.msra.mxu0 %v168
    %199 = vmatprep.subr.mxu0 0.0
    %200 = vmatpush1.msra.mxu0 %v169
    %201 = vmatprep.subr.mxu0 0.0
    %202 = vmatpush1.msra.mxu0 %v170
    %203 = vmatprep.subr.mxu0 0.0
    %204 = vmatpush1.msra.mxu0 %v171
    %205 = vmatprep.subr.mxu0 0.0
    %206 = vmatpush1.msra.mxu0 %v172
    %207 = vmatprep.subr.mxu0 0.0
    %208 = vmatpush1.msra.mxu0 %v173
    %209 = vmatprep.subr.mxu0 0.0
    %210 = vmatpush1.msra.mxu0 %v174
    %211 = vmatprep.subr.mxu0 0.0
    %212 = vmatpush1.msra.mxu0 %v175
    %213 = vmatprep.subr.mxu0 0.0
    %214 = vmatpush1.msra.mxu0 %v176
    %215 = vmatprep.subr.mxu0 0.0
    %216 = vmatpush1.msra.mxu0 %v177
    %217 = vmatprep.subr.mxu0 0.0
    %218 = vmatpush1.msra.mxu0 0.0
    %219 = vmatprep.subr.mxu0 0.0
    %220 = vmatpush1.msra.mxu0 0.0
    %221 = vmatprep.subr.mxu0 0.0
    %222 = vmatpush1.msra.mxu0 0.0
    %223 = vmatprep.subr.mxu0 0.0
    %224 = vmatpush1.msra.mxu0 0.0
    %225 = vmatprep.subr.mxu0 0.0
    %226 = vmatpush1.msra.mxu0 0.0
    %227 = vmatprep.subr.mxu0 0.0
    %228 = vmatpush1.msra.mxu0 0.0
    %229 = vmatprep.subr.mxu0 0.0
    %230 = vmatpush1.msra.mxu0 0.0
    %231 = vmatprep.subr.mxu0 0.0
    %232 = vmatpush1.msra.mxu0 0.0
    %233 = vmatprep.subr.mxu0 0.0
    %234 = vmatpush1.msra.mxu0 0.0
    %235 = vmatprep.subr.mxu0 0.0
    %236 = vmatpush1.msra.mxu0 0.0
    %237 = vmatprep.subr.mxu0 0.0
    %238 = vmatpush1.msra.mxu0 0.0
    %239 = vmatprep.subr.mxu0 0.0
    %240 = vmatpush1.msra.mxu0 0.0
    %241 = vmatprep.subr.mxu0 0.0
    %242 = vmatpush1.msra.mxu0 0.0
    %243 = vmatprep.subr.mxu0 0.0
    %244 = vmatpush1.msra.mxu0 0.0
    %245 = vmatprep.subr.mxu0 0.0
    %246 = vmatpush1.msra.mxu0 0.0
    %247 = vmatprep.subr.mxu0 0.0
    %248 = vmatpush1.msra.mxu0 0.0
    %249 = vmatprep.mubr.f32.mxu0 0.0
    %250 = vmatmul.mubr.f32.gmra.mrb[0].mxu0 %v159
    %v251 = vpop.f32.mrb[0].mxu0
    %v252 = vadd.f32 %v183, %v251
    %v253 = vpop.f32.mrb[0].mxu0
    %254 = vdwg.mxu0
    %v255 = vld [vmem:[#allocation7] sm:$0xff]
    %v256 = vld [vmem:[#allocation7 + $0x8] sm:$0xff]
    %v257 = vld [vmem:[#allocation7 + $0x10] sm:$0xff]
    %v258 = vld [vmem:[#allocation7 + $0x18] sm:$0xff]
    %v259 = vld [vmem:[#allocation7 + $0x20] sm:$0xff]
    %v260 = vld [vmem:[#allocation7 + $0x28] sm:$0xff]
    %v261 = vld [vmem:[#allocation7 + $0x30] sm:$0xff]
    %v262 = vld [vmem:[#allocation7 + $0x38] sm:$0xff]
    %v263 = vld [vmem:[#allocation7 + $0x40] sm:$0xff]
    %v264 = vld [vmem:[#allocation7 + $0x48] sm:$0xff]
    %v265 = vld [vmem:[#allocation7 + $0x50] sm:$0xff]
    %v266 = vld [vmem:[#allocation7 + $0x58] sm:$0xff]
    %v267 = vld [vmem:[#allocation7 + $0x60] sm:$0xff]
    %v268 = vld [vmem:[#allocation7 + $0x68] sm:$0xff]
    %v269 = vld [vmem:[#allocation7 + $0x70] sm:$0xff]
    %v270 = vld [vmem:[#allocation7 + $0x78] sm:$0xff]
    %v271 = vld [vmem:[%s6] sm:$0x1]
    %v273 = vlaneseq
    %v274 = vshrl.u32 %v273, 7
    %v275 = vsub.s32 0, %v274
    %v276 = vrot.slane %v271, %v275
    %278 = vmatprep.subr.mxu0 0.0
    %279 = vmatpush1.msra.mxu0 %v255
    %280 = vmatprep.subr.mxu0 0.0
    %281 = vmatpush1.msra.mxu0 %v256
    %282 = vmatprep.subr.mxu0 0.0
    %283 = vmatpush1.msra.mxu0 %v257
    %284 = vmatprep.subr.mxu0 0.0
    %285 = vmatpush1.msra.mxu0 %v258
    %286 = vmatprep.subr.mxu0 0.0
    %287 = vmatpush1.msra.mxu0 %v259
    %288 = vmatprep.subr.mxu0 0.0
    %289 = vmatpush1.msra.mxu0 %v260
    %290 = vmatprep.subr.mxu0 0.0
    %291 = vmatpush1.msra.mxu0 %v261
    %292 = vmatprep.subr.mxu0 0.0
    %293 = vmatpush1.msra.mxu0 %v262
    %294 = vmatprep.subr.mxu0 0.0
    %295 = vmatpush1.msra.mxu0 %v263
    %296 = vmatprep.subr.mxu0 0.0
    %297 = vmatpush1.msra.mxu0 %v264
    %298 = vmatprep.subr.mxu0 0.0
    %299 = vmatpush1.msra.mxu0 %v265
    %300 = vmatprep.subr.mxu0 0.0
    %301 = vmatpush1.msra.mxu0 %v266
    %302 = vmatprep.subr.mxu0 0.0
    %303 = vmatpush1.msra.mxu0 %v267
    %304 = vmatprep.subr.mxu0 0.0
    %305 = vmatpush1.msra.mxu0 %v268
    %306 = vmatprep.subr.mxu0 0.0
    %307 = vmatpush1.msra.mxu0 %v269
    %308 = vmatprep.subr.mxu0 0.0
    %309 = vmatpush1.msra.mxu0 %v270
    %310 = vmatprep.subr.mxu0 0.0
    %311 = vmatpush1.msra.mxu0 0.0
    %312 = vmatprep.subr.mxu0 0.0
    %313 = vmatpush1.msra.mxu0 0.0
    %314 = vmatprep.subr.mxu0 0.0
    %315 = vmatpush1.msra.mxu0 0.0
    %316 = vmatprep.subr.mxu0 0.0
    %317 = vmatpush1.msra.mxu0 0.0
    %318 = vmatprep.subr.mxu0 0.0
    %319 = vmatpush1.msra.mxu0 0.0
    %320 = vmatprep.subr.mxu0 0.0
    %321 = vmatpush1.msra.mxu0 0.0
    %322 = vmatprep.subr.mxu0 0.0
    %323 = vmatpush1.msra.mxu0 0.0
    %324 = vmatprep.subr.mxu0 0.0
    %325 = vmatpush1.msra.mxu0 0.0
    %326 = vmatprep.subr.mxu0 0.0
    %327 = vmatpush1.msra.mxu0 0.0
    %328 = vmatprep.subr.mxu0 0.0
    %329 = vmatpush1.msra.mxu0 0.0
    %330 = vmatprep.subr.mxu0 0.0
    %331 = vmatpush1.msra.mxu0 0.0
    %332 = vmatprep.subr.mxu0 0.0
    %333 = vmatpush1.msra.mxu0 0.0
    %334 = vmatprep.subr.mxu0 0.0
    %335 = vmatpush1.msra.mxu0 0.0
    %336 = vmatprep.subr.mxu0 0.0
    %337 = vmatpush1.msra.mxu0 0.0
    %338 = vmatprep.subr.mxu0 0.0
    %339 = vmatpush1.msra.mxu0 0.0
    %340 = vmatprep.subr.mxu0 0.0
    %341 = vmatpush1.msra.mxu0 0.0
    %342 = vmatprep.mubr.f32.mxu0 0.0
    %343 = vmatmul.mubr.f32.gmra.mrb[0].mxu0 %v252
    %v344 = vpop.f32.mrb[0].mxu0
    %v345 = vadd.f32 %v276, %v344
    %v346 = vpop.f32.mrb[0].mxu0
    %347 = vdwg.mxu0
    %348 = vst [vmem:[#allocation8] sm:$0xff] %v345
    // Predicated region
    $region42: #{mlp_forward.1} parent=1 // pred_check
      _
    $region43: #{mlp_forward.1} parent=1 // pred_check_branch
      %350 = sbr.rel (0) target = $region45
    $region44: #{mlp_forward.1} parent=1 // pred_region
      %s352 = ssub.s32 128, 128
      %353 = vsyncadd [#allocation4], %s352
      %s355 = sshll.u32 [#allocation8], 4
      %s356 = int_to_ptr.vmem [resolvable:$true] %s355
      %358 = dma.vmem_to_hbm [thread:$0]  %s356, 128, %s7, [#allocation4]
    $region45: #{mlp_forward.1} parent=1 // pred_fallthru
      _
    // Predicated region
    $region46: #{mlp_forward.1} parent=1 // pred_check
      _
    $region47: #{mlp_forward.1} parent=1 // pred_check_branch
      %360 = sbr.rel (0) target = $region49
    $region48: #{mlp_forward.1} parent=1 // pred_region
      %361 = dma.done [#allocation4], 128
    $region49: #{mlp_forward.1} parent=1 // pred_fallthru
      _
    %362 = vsyncpa [#allocation3], 1
    %363 = vsyncpa [#allocation6], 1
    %364 = vsyncpa [#allocation4], 1

</llo_original>
